<compile_context>
chip_gen: v6e
topology: v6e:2x2x1
jax: 0.10.0
libtpu: 0.0.40
codegen_flags: <defaults>
</compile_context>

<pallas_src>
import functools

import jax
import jax.numpy as jnp
from jax.experimental import pallas as pl
from jax.experimental.pallas import tpu as pltpu

_LANES = 128
_MAX_BATCH_TILE = 2048   # per-step VMEM footprint at 2048 rows is ~3 MB: tiny
_SUBLANE = 16            # bf16 sublane packing for multi-step output tiles


def _round_up(x, m):
    return ((x + m - 1) // m) * m


def _num_tensorcores():
    """Best-effort detection of TensorCores per chip (v7x has 2)."""
    try:
        kind = jax.devices()[0].device_kind.lower()
    except Exception:
        return 1
    return 2 if ("v7" in kind or "7x" in kind) else 1


def _choose_tiling(batch, n_tc):
    """Pick (batch_tile, padded_batch, steps).

    Fewest grid steps possible: 1 on single-TC chips, n_tc on multi-TC chips
    (so no TensorCore idles), more only if batch exceeds the per-step cap.
    For a single-step grid we use full-array block shapes so no padding of
    the batch axis is needed at all.
    """
    batch = max(batch, 1)
    steps = pl.cdiv(batch, _MAX_BATCH_TILE)
    if batch >= 2 * _SUBLANE:
        steps = max(steps, n_tc)
    if steps == 1:
        return batch, batch, 1
    tb = _round_up(pl.cdiv(batch, steps), _SUBLANE)
    return tb, tb * steps, steps


def _mlp_kernel(x_ref, w1_ref, b1_ref, w2_ref, b2_ref, wo_ref, bo_ref, o_ref):
    """Fused 2-hidden-layer MLP forward for one batch tile.

    x tile is f32 (cast to bf16 in-kernel). Weights bf16, biases f32 (1, out).
    Three MXU matmuls with f32 accumulation; ReLU in bf16 on the VPU.
    """
    x = x_ref[...].astype(w1_ref.dtype)                     # in-kernel cast
    h = jnp.dot(x, w1_ref[...], preferred_element_type=jnp.float32) + b1_ref[...]
    h = jnp.maximum(h.astype(w2_ref.dtype), 0)              # bf16 ReLU
    h = jnp.dot(h, w2_ref[...], preferred_element_type=jnp.float32) + b2_ref[...]
    h = jnp.maximum(h.astype(wo_ref.dtype), 0)
    out = jnp.dot(h, wo_ref[...], preferred_element_type=jnp.float32) + bo_ref[...]
    o_ref[...] = out.astype(o_ref.dtype)                    # bf16 store


def _resident_spec(arr):
    """Whole-array block with a constant index_map: the operand is DMA'd into
    VMEM once and stays resident across all grid steps (no per-step re-DMA).
    ndim is bound per call, so there is no late-binding-lambda bug."""
    ndim = arr.ndim
    return pl.BlockSpec(arr.shape, lambda i: (0,) * ndim)


@functools.partial(jax.jit, static_argnames=("n_actions",))
def qnetwork_forward(x, params, *, n_actions):
    """Pallas-backed QNetwork.forward.

    x: (B, state_dimension) float32.
    params: dict from init_qnetwork_params (bf16 weights padded to 128 lanes,
            f32 biases).
    Returns: (B, n_actions) float32 action values.
    """
    w1, b1 = params["w1"], params["b1"]
    w2, b2 = params["w2"], params["b2"]
    wo, bo = params["wo"], params["bo"]

    batch, d_in = x.shape
    h1p = w1.shape[1]
    h2p = w2.shape[1]
    n_pad = wo.shape[1]                          # number_actions padded to 128

    tb, b_pad, steps = _choose_tiling(batch, _num_tensorcores())

    x_in = x
    if b_pad != batch:                           # only for multi-step ragged grids
        x_in = jnp.pad(x, ((0, b_pad - batch), (0, 0)))

    in_specs = [
        pl.BlockSpec((tb, d_in), lambda i: (i, 0)),   # x: tiled over batch
        _resident_spec(w1), _resident_spec(b1),
        _resident_spec(w2), _resident_spec(b2),
        _resident_spec(wo), _resident_spec(bo),
    ]
    out_spec = pl.BlockSpec((tb, n_pad), lambda i: (i, 0))   # lane-dense stores

    def _nbytes(a):
        return a.size * a.dtype.itemsize

    cost = pl.CostEstimate(
        flops=2 * b_pad * (d_in * h1p + h1p * h2p + h2p * n_pad),
        transcendentals=0,
        bytes_accessed=(_nbytes(x_in) + b_pad * n_pad * 2
                        + sum(_nbytes(a) for a in (w1, b1, w2, b2, wo, bo))),
    )

    out_padded = pl.pallas_call(
        _mlp_kernel,
        out_shape=jax.ShapeDtypeStruct((b_pad, n_pad), jnp.bfloat16),
        grid=(steps,),
        in_specs=in_specs,
        out_specs=out_spec,
        compiler_params=pltpu.CompilerParams(
            dimension_semantics=("parallel",)),   # v7x: one step per TensorCore
        cost_estimate=cost,
    )(x_in, w1, b1, w2, b2, wo, bo)

    return out_padded[:batch, :n_actions].astype(jnp.float32)


def init_qnetwork_params(key, state_dimension, hidden_layers, number_actions,
                         weight_dtype=jnp.bfloat16):
    """Deterministic init mirroring nn.Linear's U(-1/sqrt(fan_in), +1/sqrt(fan_in)).

    Weights are stored as (in_features, out_features) -- transposed vs
    PyTorch's (out, in) -- so the kernel does x @ W + b. Every layer's output
    width (including the hidden 64s and the final number_actions) is
    zero-padded up to a multiple of 128 lanes; the padded columns carry zero
    weight and zero bias, so after ReLU they contribute nothing downstream and
    the wrapper slices them off the final output.
    """
    assert len(hidden_layers) == 2, "kernel is specialized to two hidden layers"
    real_sizes = [state_dimension] + list(hidden_layers) + [number_actions]
    pad_sizes = [state_dimension] + [_round_up(s, _LANES) for s in real_sizes[1:]]
    wnames, bnames = ["w1", "w2", "wo"], ["b1", "b2", "bo"]
    params = {}
    keys = jax.random.split(key, 2 * len(wnames))
    for i in range(len(wnames)):
        fan_in, fan_out = real_sizes[i], real_sizes[i + 1]
        fan_in_p, fan_out_p = pad_sizes[i], pad_sizes[i + 1]
        bound = float(fan_in) ** -0.5
        w = jax.random.uniform(keys[2 * i], (fan_in, fan_out), jnp.float32,
                               -bound, bound)
        b = jax.random.uniform(keys[2 * i + 1], (1, fan_out), jnp.float32,
                               -bound, bound)
        w = jnp.pad(w, ((0, fan_in_p - fan_in), (0, fan_out_p - fan_out)))
        b = jnp.pad(b, ((0, 0), (0, fan_out_p - fan_out)))
        params[wnames[i]] = w.astype(weight_dtype)
        params[bnames[i]] = b                      # biases stay f32
    return params


def qnetwork_forward_ref(x, params, n_actions):
    """Pure-JAX reference matching the kernel's numerics
    (bf16 operands, f32 accumulation, bf16 ReLU, bf16 output rounding)."""
    w1, b1 = params["w1"], params["b1"]
    w2, b2 = params["w2"], params["b2"]
    wo, bo = params["wo"], params["bo"]
    h = x.astype(w1.dtype)
    h = jnp.maximum((jnp.dot(h, w1, preferred_element_type=jnp.float32)
                     + b1).astype(w2.dtype), 0)
    h = jnp.maximum((jnp.dot(h, w2, preferred_element_type=jnp.float32)
                     + b2).astype(wo.dtype), 0)
    out = jnp.dot(h, wo, preferred_element_type=jnp.float32) + bo
    out = out.astype(jnp.bfloat16).astype(jnp.float32)
    return out[:, :n_actions]


if __name__ == "__main__":
    state_dimension = 8
    hidden_layers = [64, 64]   # stand-in for the module-level global `hidden_layers`
    number_actions = 4
    batch = 2

    key = jax.random.PRNGKey(0)
    pkey, xkey, xkey_big = jax.random.split(key, 3)
    params = init_qnetwork_params(pkey, state_dimension, hidden_layers,
                                  number_actions)

    # Small shape consistent with the module (single-transition evaluate()):
    # single grid step, no batch padding, full-array blocks.
    x = jax.random.normal(xkey, (batch, state_dimension), jnp.float32)
    out = jax.block_until_ready(qnetwork_forward(x, params,
                                                 n_actions=number_actions))
    ref = qnetwork_forward_ref(x, params, number_actions)
    assert out.shape == (batch, number_actions)
    assert jnp.allclose(out, ref, atol=1e-2, rtol=1e-2)

    # Batched replay-buffer shape: 1 grid step on v5e/v6e, 2 steps (one per
    # TensorCore) on v7x, VMEM-resident parameters throughout.
    x_big = jax.random.normal(xkey_big, (1024, state_dimension), jnp.float32)
    out_big = jax.block_until_ready(qnetwork_forward(x_big, params,
                                                     n_actions=number_actions))
    ref_big = qnetwork_forward_ref(x_big, params, number_actions)
    assert out_big.shape == (1024, number_actions)
    assert jnp.allclose(out_big, ref_big, atol=1e-2, rtol=1e-2)

    print("KERNEL_OK")
</pallas_src>

<mosaic_0001>
module attributes {stable_mosaic.version = 11 : i64} {
  func.func @_mlp_kernel(%arg0: i32, %arg1: memref<2x8xf32, #tpu.memory_space<vmem>>, %arg2: memref<8x128xbf16, #tpu.memory_space<vmem>>, %arg3: memref<1x128xf32, #tpu.memory_space<vmem>>, %arg4: memref<128x128xbf16, #tpu.memory_space<vmem>>, %arg5: memref<1x128xf32, #tpu.memory_space<vmem>>, %arg6: memref<128x128xbf16, #tpu.memory_space<vmem>>, %arg7: memref<1x128xf32, #tpu.memory_space<vmem>>, %arg8: memref<2x128xbf16, #tpu.memory_space<vmem>>) attributes {dimension_semantics = [#tpu.dimension_semantics<parallel>], iteration_bounds = array<i64: 1>, scalar_prefetch = 0 : i64, scratch_operands = 0 : i64, tpu.core_type = #tpu.core_type<tc>, window_params = [{transform_indices = @transform_0, window_bounds = array<i64: 2, 8>}, {pipeline_mode = #tpu.pipeline_mode<synchronous>, transform_indices = @transform_1, window_bounds = array<i64: 8, 128>}, {pipeline_mode = #tpu.pipeline_mode<synchronous>, transform_indices = @transform_2, window_bounds = array<i64: 1, 128>}, {pipeline_mode = #tpu.pipeline_mode<synchronous>, transform_indices = @transform_3, window_bounds = array<i64: 128, 128>}, {pipeline_mode = #tpu.pipeline_mode<synchronous>, transform_indices = @transform_4, window_bounds = array<i64: 1, 128>}, {pipeline_mode = #tpu.pipeline_mode<synchronous>, transform_indices = @transform_5, window_bounds = array<i64: 128, 128>}, {pipeline_mode = #tpu.pipeline_mode<synchronous>, transform_indices = @transform_6, window_bounds = array<i64: 1, 128>}, {transform_indices = @transform_7, window_bounds = array<i64: 2, 128>}]} {
    %c0 = arith.constant 0 : index
    %c0_0 = arith.constant 0 : index
    %0 = vector.load %arg1[%c0, %c0_0] : memref<2x8xf32, #tpu.memory_space<vmem>>, vector<2x8xf32>
    %1 = arith.truncf %0 : vector<2x8xf32> to vector<2x8xbf16>
    %c0_1 = arith.constant 0 : index
    %c0_2 = arith.constant 0 : index
    %2 = vector.load %arg2[%c0_1, %c0_2] : memref<8x128xbf16, #tpu.memory_space<vmem>>, vector<8x128xbf16>
    %cst = arith.constant dense<0.000000e+00> : vector<2x128xf32>
    %3 = tpu.matmul %1, %2, %cst {dimension_numbers = #tpu.dot_dimension_numbers<[1], [0], [0], [1], [0, 0, 1, 1], [], []>} : vector<2x8xbf16>, vector<8x128xbf16>, vector<2x128xf32> -> vector<2x128xf32>
    %c0_3 = arith.constant 0 : index
    %c0_4 = arith.constant 0 : index
    %4 = vector.load %arg3[%c0_3, %c0_4] : memref<1x128xf32, #tpu.memory_space<vmem>>, vector<1x128xf32>
    %5 = vector.broadcast %4 : vector<1x128xf32> to vector<2x128xf32>
    %6 = arith.addf %3, %5 : vector<2x128xf32>
    %7 = arith.truncf %6 : vector<2x128xf32> to vector<2x128xbf16>
    %cst_5 = arith.constant 0.000000e+00 : bf16
    %8 = vector.broadcast %cst_5 : bf16 to vector<2x128xbf16>
    %9 = arith.maximumf %7, %8 : vector<2x128xbf16>
    %c0_6 = arith.constant 0 : index
    %c0_7 = arith.constant 0 : index
    %10 = vector.load %arg4[%c0_6, %c0_7] : memref<128x128xbf16, #tpu.memory_space<vmem>>, vector<128x128xbf16>
    %cst_8 = arith.constant dense<0.000000e+00> : vector<2x128xf32>
    %11 = tpu.matmul %9, %10, %cst_8 {dimension_numbers = #tpu.dot_dimension_numbers<[1], [0], [0], [1], [0, 0, 1, 1], [], []>} : vector<2x128xbf16>, vector<128x128xbf16>, vector<2x128xf32> -> vector<2x128xf32>
    %c0_9 = arith.constant 0 : index
    %c0_10 = arith.constant 0 : index
    %12 = vector.load %arg5[%c0_9, %c0_10] : memref<1x128xf32, #tpu.memory_space<vmem>>, vector<1x128xf32>
    %13 = vector.broadcast %12 : vector<1x128xf32> to vector<2x128xf32>
    %14 = arith.addf %11, %13 : vector<2x128xf32>
    %15 = arith.truncf %14 : vector<2x128xf32> to vector<2x128xbf16>
    %cst_11 = arith.constant 0.000000e+00 : bf16
    %16 = vector.broadcast %cst_11 : bf16 to vector<2x128xbf16>
    %17 = arith.maximumf %15, %16 : vector<2x128xbf16>
    %c0_12 = arith.constant 0 : index
    %c0_13 = arith.constant 0 : index
    %18 = vector.load %arg6[%c0_12, %c0_13] : memref<128x128xbf16, #tpu.memory_space<vmem>>, vector<128x128xbf16>
    %cst_14 = arith.constant dense<0.000000e+00> : vector<2x128xf32>
    %19 = tpu.matmul %17, %18, %cst_14 {dimension_numbers = #tpu.dot_dimension_numbers<[1], [0], [0], [1], [0, 0, 1, 1], [], []>} : vector<2x128xbf16>, vector<128x128xbf16>, vector<2x128xf32> -> vector<2x128xf32>
    %c0_15 = arith.constant 0 : index
    %c0_16 = arith.constant 0 : index
    %20 = vector.load %arg7[%c0_15, %c0_16] : memref<1x128xf32, #tpu.memory_space<vmem>>, vector<1x128xf32>
    %21 = vector.broadcast %20 : vector<1x128xf32> to vector<2x128xf32>
    %22 = arith.addf %19, %21 : vector<2x128xf32>
    %23 = arith.truncf %22 : vector<2x128xf32> to vector<2x128xbf16>
    %c0_17 = arith.constant 0 : index
    %c0_18 = arith.constant 0 : index
    %24 = vector.load %arg8[%c0_17, %c0_18] : memref<2x128xbf16, #tpu.memory_space<vmem>>, vector<2x128xbf16>
    tpu.vector_store %arg8[%c0_17, %c0_18], %23 {strides = array<i32>} : memref<2x128xbf16, #tpu.memory_space<vmem>>, vector<2x128xbf16>,
    return
  }
  func.func @transform_0(%arg0: i32) -> (i32, i32) {
    %c0_i32 = arith.constant 0 : i32
    %c0_i32_0 = arith.constant 0 : i32
    return %arg0, %c0_i32 : i32, i32
  }
  func.func @transform_1(%arg0: i32) -> (i32, i32) {
    %c0_i32 = arith.constant 0 : i32
    %c0_i32_0 = arith.constant 0 : i32
    %c0_i32_1 = arith.constant 0 : i32
    return %c0_i32, %c0_i32_0 : i32, i32
  }
  func.func @transform_2(%arg0: i32) -> (i32, i32) {
    %c0_i32 = arith.constant 0 : i32
    %c0_i32_0 = arith.constant 0 : i32
    %c0_i32_1 = arith.constant 0 : i32
    return %c0_i32, %c0_i32_0 : i32, i32
  }
  func.func @transform_3(%arg0: i32) -> (i32, i32) {
    %c0_i32 = arith.constant 0 : i32
    %c0_i32_0 = arith.constant 0 : i32
    %c0_i32_1 = arith.constant 0 : i32
    return %c0_i32, %c0_i32_0 : i32, i32
  }
  func.func @transform_4(%arg0: i32) -> (i32, i32) {
    %c0_i32 = arith.constant 0 : i32
    %c0_i32_0 = arith.constant 0 : i32
    %c0_i32_1 = arith.constant 0 : i32
    return %c0_i32, %c0_i32_0 : i32, i32
  }
  func.func @transform_5(%arg0: i32) -> (i32, i32) {
    %c0_i32 = arith.constant 0 : i32
    %c0_i32_0 = arith.constant 0 : i32
    %c0_i32_1 = arith.constant 0 : i32
    return %c0_i32, %c0_i32_0 : i32, i32
  }
  func.func @transform_6(%arg0: i32) -> (i32, i32) {
    %c0_i32 = arith.constant 0 : i32
    %c0_i32_0 = arith.constant 0 : i32
    %c0_i32_1 = arith.constant 0 : i32
    return %c0_i32, %c0_i32_0 : i32, i32
  }
  func.func @transform_7(%arg0: i32) -> (i32, i32) {
    %c0_i32 = arith.constant 0 : i32
    %c0_i32_0 = arith.constant 0 : i32
    return %arg0, %c0_i32 : i32, i32
  }
}

</mosaic_0001>

<llo_original>
// kernel: qnetwork_forward.1
$region0: #{qnetwork_forward.1}
  #allocation0 [shape = 'u32[]', space=smem, size = 0x4, offset = 0x4, fixed_abs, tag = 'smem constant byte address 0x4 - core index']
  #allocation1 [shape = 'u32[144,128]{1,0:T(1,128)}', space=vmem, size = 0x12000, scoped, tag = 'internal scratch']
  %s0 = inlined_call_operand.hbm [shape: f32[2,8], index: 0, kind: input, shape index: {}]
  %s1 = inlined_call_operand.vmem [shape: bf16[8,128], index: 1, kind: input, shape index: {}]
  %s2 = inlined_call_operand.vmem [shape: f32[1,128], index: 2, kind: input, shape index: {}]
  %s3 = inlined_call_operand.hbm [shape: bf16[128,128], index: 3, kind: input, shape index: {}]
  %s4 = inlined_call_operand.vmem [shape: f32[1,128], index: 4, kind: input, shape index: {}]
  %s5 = inlined_call_operand.hbm [shape: bf16[128,128], index: 5, kind: input, shape index: {}]
  %s6 = inlined_call_operand.vmem [shape: f32[1,128], index: 6, kind: input, shape index: {}]
  %s7 = inlined_call_operand.vmem [shape: bf16[2,128], index: 7, kind: output, shape index: {}]
  %s8 = sld [smem:[#allocation0]]
  $region50: #{qnetwork_forward.1} parent=0
    _
  %s10 = ssub.s32 1, %s8
  %s11 = scalar_select 0, %s10, %s8
  $region1: #{qnetwork_forward.1} parent=0
    #allocation2 [shape = 'u8[1024]{0}', space=vmem, size = 0x400, scoped, tag = 'input window, operand 0, single buffered']
    #allocation3 [shape = 's32[1]{0}', space=sflag, size = 0x4, scoped, tag = 'scoped memory for qnetwork_forward.1']
    #allocation4 [shape = 'u8[32768]{0}', space=vmem, size = 0x8000, scoped, tag = 'input window, operand 3, single buffered']
    #allocation5 [shape = 's32[1]{0}', space=sflag, size = 0x4, scoped, tag = 'scoped memory for qnetwork_forward.1']
    #allocation6 [shape = 'u8[32768]{0}', space=vmem, size = 0x8000, scoped, tag = 'input window, operand 5, single buffered']
    %12 = vsyncpa [#allocation3], 0
    %13 = vsyncpa [#allocation5], 0
    // Predicated region
    $region2: #{qnetwork_forward.1} parent=1 // pred_check
      _
    $region3: #{qnetwork_forward.1} parent=1 // pred_check_branch
      %15 = sbr.rel (0) target = $region5
    $region4: #{qnetwork_forward.1} parent=1 // pred_region
      %s17 = ssub.s32 32, 32
      %18 = vsyncadd [#allocation3], %s17
      %s20 = sshll.u32 [#allocation2], 4
      %s21 = int_to_ptr.vmem [resolvable:$true] %s20
      %23 = dma.hbm_to_vmem [thread:$0]  %s0, 32, %s21, [#allocation3]
    $region5: #{qnetwork_forward.1} parent=1 // pred_fallthru
      _
    // Predicated region
    $region6: #{qnetwork_forward.1} parent=1 // pred_check
      _
    $region7: #{qnetwork_forward.1} parent=1 // pred_check_branch
      %25 = sbr.rel (0) target = $region9
    $region8: #{qnetwork_forward.1} parent=1 // pred_region
      _
    $region9: #{qnetwork_forward.1} parent=1 // pred_fallthru
      _
    // Predicated region
    $region10: #{qnetwork_forward.1} parent=1 // pred_check
      _
    $region11: #{qnetwork_forward.1} parent=1 // pred_check_branch
      %27 = sbr.rel (0) target = $region13
    $region12: #{qnetwork_forward.1} parent=1 // pred_region
      _
    $region13: #{qnetwork_forward.1} parent=1 // pred_fallthru
      _
    // Predicated region
    $region14: #{qnetwork_forward.1} parent=1 // pred_check
      _
    $region15: #{qnetwork_forward.1} parent=1 // pred_check_branch
      %29 = sbr.rel (0) target = $region17
    $region16: #{qnetwork_forward.1} parent=1 // pred_region
      %s31 = ssub.s32 1024, 1024
      %32 = vsyncadd [#allocation5], %s31
      %s33 = sshll.u32 [#allocation4], 4
      %s34 = int_to_ptr.vmem [resolvable:$true] %s33
      %39 = dma.hbm_to_vmem [thread:$0]  %s3, 1024, %s34, [#allocation5], 64, 64, 4
    $region17: #{qnetwork_forward.1} parent=1 // pred_fallthru
      _
    // Predicated region
    $region18: #{qnetwork_forward.1} parent=1 // pred_check
      _
    $region19: #{qnetwork_forward.1} parent=1 // pred_check_branch
      %41 = sbr.rel (0) target = $region21
    $region20: #{qnetwork_forward.1} parent=1 // pred_region
      _
    $region21: #{qnetwork_forward.1} parent=1 // pred_fallthru
      _
    // Predicated region
    $region22: #{qnetwork_forward.1} parent=1 // pred_check
      _
    $region23: #{qnetwork_forward.1} parent=1 // pred_check_branch
      %43 = sbr.rel (0) target = $region25
    $region24: #{qnetwork_forward.1} parent=1 // pred_region
      %s45 = ssub.s32 1024, 1024
      %46 = vsyncadd [#allocation5], %s45
      %s47 = sshll.u32 [#allocation6], 4
      %s48 = int_to_ptr.vmem [resolvable:$true] %s47
      %53 = dma.hbm_to_vmem [thread:$0]  %s5, 1024, %s48, [#allocation5], 64, 64, 4
    $region25: #{qnetwork_forward.1} parent=1 // pred_fallthru
      _
    // Predicated region
    $region26: #{qnetwork_forward.1} parent=1 // pred_check
      _
    $region27: #{qnetwork_forward.1} parent=1 // pred_check_branch
      %55 = sbr.rel (0) target = $region29
    $region28: #{qnetwork_forward.1} parent=1 // pred_region
      _
    $region29: #{qnetwork_forward.1} parent=1 // pred_fallthru
      _
    // Predicated region
    $region30: #{qnetwork_forward.1} parent=1 // pred_check
      _
    $region31: #{qnetwork_forward.1} parent=1 // pred_check_branch
      %57 = sbr.rel (0) target = $region33
    $region32: #{qnetwork_forward.1} parent=1 // pred_region
      %58 = dma.done [#allocation3], 32
    $region33: #{qnetwork_forward.1} parent=1 // pred_fallthru
      _
    // Predicated region
    $region34: #{qnetwork_forward.1} parent=1 // pred_check
      _
    $region35: #{qnetwork_forward.1} parent=1 // pred_check_branch
      %60 = sbr.rel (0) target = $region37
    $region36: #{qnetwork_forward.1} parent=1 // pred_region
      %61 = dma.done [#allocation5], 1024
    $region37: #{qnetwork_forward.1} parent=1 // pred_fallthru
      _
    // Predicated region
    $region38: #{qnetwork_forward.1} parent=1 // pred_check
      _
    $region39: #{qnetwork_forward.1} parent=1 // pred_check_branch
      %63 = sbr.rel (0) target = $region41
    $region40: #{qnetwork_forward.1} parent=1 // pred_region
      %64 = dma.done [#allocation5], 1024
    $region41: #{qnetwork_forward.1} parent=1 // pred_fallthru
      _
    %v66 = vld [vmem:[#allocation2] sm:$0x3]
    %v67 = vpack.c.bf16 %v66, %v66
    %v68 = vld [vmem:[%s1] sm:$0xf]
    %v69 = vld [vmem:[%s2] sm:$0x1]
    %v71 = vlaneseq
    %v72 = vshrl.u32 %v71, 7
    %v73 = vsub.s32 0, %v72
    %v74 = vrot.slane %v69, %v73
    %vm76 = vcmask 64512
    %v78 = vsel %vm76, %v67, 0
    %vm80 = vcmask 1043456
    %v82 = vsel %vm80, %v68, 0
    %84 = vmatprep.subr.bf16.mxu0 0
    %85 = vmatpush1.bf16.msra.mxu0 0
    %86 = vmatprep.subr.bf16.mxu0 0
    %87 = vmatpush1.bf16.msra.mxu0 0
    %88 = vmatprep.subr.bf16.mxu0 0
    %89 = vmatpush1.bf16.msra.mxu0 0
    %90 = vmatprep.subr.bf16.mxu0 0
    %91 = vmatpush1.bf16.msra.mxu0 0
    %92 = vmatprep.subr.bf16.mxu0 0
    %93 = vmatpush1.bf16.msra.mxu0 0
    %94 = vmatprep.subr.bf16.mxu0 0
    %95 = vmatpush1.bf16.msra.mxu0 0
    %96 = vmatprep.subr.bf16.mxu0 0
    %97 = vmatpush1.bf16.msra.mxu0 0
    %98 = vmatprep.subr.bf16.mxu0 0
    %99 = vmatpush1.bf16.msra.mxu0 %v82
    %100 = vmatprep.subr.bf16.mxu0 0
    %101 = vmatpush2.bf16.msra.mxu0 0
    %102 = vmatprep.subr.bf16.mxu0 0
    %103 = vmatpush2.bf16.msra.mxu0 0
    %104 = vmatprep.subr.bf16.mxu0 0
    %105 = vmatpush2.bf16.msra.mxu0 0
    %106 = vmatprep.subr.bf16.mxu0 0
    %107 = vmatpush2.bf16.msra.mxu0 0
    %108 = vmatprep.subr.bf16.mxu0 0
    %109 = vmatpush2.bf16.msra.mxu0 0
    %110 = vmatprep.subr.bf16.mxu0 0
    %111 = vmatpush2.bf16.msra.mxu0 0
    %112 = vmatprep.subr.bf16.mxu0 0
    %113 = vmatpush2.bf16.msra.mxu0 0
    %114 = vmatprep.subr.bf16.mxu0 0
    %115 = vmatpush2.bf16.msra.mxu0 0
    %116 = vmatprep.mubr.bf16.mxu0 0
    %117 = vmatmul.mubr.bf16.gmra.mxu0 %v78
    %v118 = vpop.f32.mrf.mxu0
    %v119 = vadd.f32 %v74, %v118
    %v120 = vpop.f32.mrf.mxu0
    %v121 = vpop.f32.mrf.mxu0
    %v122 = vpop.f32.mrf.mxu0
    %123 = vdwg.mxu0
    %v124 = vpack.c.bf16 %v119, %v119
    %v125 = vmax.bf16 %v124, 0
    %v126 = vld [vmem:[#allocation4] sm:$0xf]
    %v127 = vld [vmem:[#allocation4 + $0x4] sm:$0xf]
    %v128 = vld [vmem:[#allocation4 + $0x8] sm:$0xf]
    %v129 = vld [vmem:[#allocation4 + $0xc] sm:$0xf]
    %v130 = vld [vmem:[#allocation4 + $0x10] sm:$0xf]
    %v131 = vld [vmem:[#allocation4 + $0x14] sm:$0xf]
    %v132 = vld [vmem:[#allocation4 + $0x18] sm:$0xf]
    %v133 = vld [vmem:[#allocation4 + $0x1c] sm:$0xf]
    %v134 = vld [vmem:[#allocation4 + $0x20] sm:$0xf]
    %v135 = vld [vmem:[#allocation4 + $0x24] sm:$0xf]
    %v136 = vld [vmem:[#allocation4 + $0x28] sm:$0xf]
    %v137 = vld [vmem:[#allocation4 + $0x2c] sm:$0xf]
    %v138 = vld [vmem:[#allocation4 + $0x30] sm:$0xf]
    %v139 = vld [vmem:[#allocation4 + $0x34] sm:$0xf]
    %v140 = vld [vmem:[#allocation4 + $0x38] sm:$0xf]
    %v141 = vld [vmem:[#allocation4 + $0x3c] sm:$0xf]
    %v142 = vld [vmem:[%s4] sm:$0x1]
    %v144 = vlaneseq
    %v145 = vshrl.u32 %v144, 7
    %v146 = vsub.s32 0, %v145
    %v147 = vrot.slane %v142, %v146
    %v165 = vunpack.c.l.b16 %v126
    %v166 = vunpack.c.l.b16 %v127
    %v167 = vunpack.c.l.b16 %v128
    %v168 = vunpack.c.l.b16 %v129
    %v169 = vunpack.c.l.b16 %v130
    %v170 = vunpack.c.l.b16 %v131
    %v171 = vunpack.c.l.b16 %v132
    %v172 = vunpack.c.l.b16 %v133
    %v173 = vunpack.c.l.b16 %v134
    %v174 = vunpack.c.l.b16 %v135
    %v175 = vunpack.c.l.b16 %v136
    %v176 = vunpack.c.l.b16 %v137
    %v177 = vunpack.c.l.b16 %v138
    %v178 = vunpack.c.l.b16 %v139
    %v179 = vunpack.c.l.b16 %v140
    %v180 = vunpack.c.l.b16 %v141
    %v181 = vpack.c.b16 %v166, %v165
    %v182 = vpack.c.b16 %v168, %v167
    %v183 = vpack.c.b16 %v170, %v169
    %v184 = vpack.c.b16 %v172, %v171
    %v185 = vpack.c.b16 %v174, %v173
    %v186 = vpack.c.b16 %v176, %v175
    %v187 = vpack.c.b16 %v178, %v177
    %v188 = vpack.c.b16 %v180, %v179
    %197 = vmatprep.subr.bf16.mxu0 0
    %198 = vmatpush1.bf16.msra.mxu0 %v188
    %199 = vmatprep.subr.bf16.mxu0 0
    %200 = vmatpush1.bf16.msra.mxu0 %v187
    %201 = vmatprep.subr.bf16.mxu0 0
    %202 = vmatpush1.bf16.msra.mxu0 %v186
    %203 = vmatprep.subr.bf16.mxu0 0
    %204 = vmatpush1.bf16.msra.mxu0 %v185
    %205 = vmatprep.subr.bf16.mxu0 0
    %206 = vmatpush1.bf16.msra.mxu0 %v184
    %207 = vmatprep.subr.bf16.mxu0 0
    %208 = vmatpush1.bf16.msra.mxu0 %v183
    %209 = vmatprep.subr.bf16.mxu0 0
    %210 = vmatpush1.bf16.msra.mxu0 %v182
    %211 = vmatprep.subr.bf16.mxu0 0
    %212 = vmatpush1.bf16.msra.mxu0 %v181
    %213 = vmatprep.subr.bf16.mxu0 0
    %214 = vmatpush2.bf16.msra.mxu0 0
    %215 = vmatprep.subr.bf16.mxu0 0
    %216 = vmatpush2.bf16.msra.mxu0 0
    %217 = vmatprep.subr.bf16.mxu0 0
    %218 = vmatpush2.bf16.msra.mxu0 0
    %219 = vmatprep.subr.bf16.mxu0 0
    %220 = vmatpush2.bf16.msra.mxu0 0
    %221 = vmatprep.subr.bf16.mxu0 0
    %222 = vmatpush2.bf16.msra.mxu0 0
    %223 = vmatprep.subr.bf16.mxu0 0
    %224 = vmatpush2.bf16.msra.mxu0 0
    %225 = vmatprep.subr.bf16.mxu0 0
    %226 = vmatpush2.bf16.msra.mxu0 0
    %227 = vmatprep.subr.bf16.mxu0 0
    %228 = vmatpush2.bf16.msra.mxu0 0
    %229 = vmatprep.mubr.bf16.mxu0 0
    %230 = vmatmul.mubr.bf16.gmra.mxu0 %v125
    %v231 = vpop.f32.mrf.mxu0
    %v232 = vadd.f32 %v147, %v231
    %v233 = vpop.f32.mrf.mxu0
    %v234 = vpop.f32.mrf.mxu0
    %v235 = vpop.f32.mrf.mxu0
    %236 = vdwg.mxu0
    %v237 = vpack.c.bf16 %v232, %v232
    %v238 = vmax.bf16 %v237, 0
    %v239 = vld [vmem:[#allocation6] sm:$0xf]
    %v240 = vld [vmem:[#allocation6 + $0x4] sm:$0xf]
    %v241 = vld [vmem:[#allocation6 + $0x8] sm:$0xf]
    %v242 = vld [vmem:[#allocation6 + $0xc] sm:$0xf]
    %v243 = vld [vmem:[#allocation6 + $0x10] sm:$0xf]
    %v244 = vld [vmem:[#allocation6 + $0x14] sm:$0xf]
    %v245 = vld [vmem:[#allocation6 + $0x18] sm:$0xf]
    %v246 = vld [vmem:[#allocation6 + $0x1c] sm:$0xf]
    %v247 = vld [vmem:[#allocation6 + $0x20] sm:$0xf]
    %v248 = vld [vmem:[#allocation6 + $0x24] sm:$0xf]
    %v249 = vld [vmem:[#allocation6 + $0x28] sm:$0xf]
    %v250 = vld [vmem:[#allocation6 + $0x2c] sm:$0xf]
    %v251 = vld [vmem:[#allocation6 + $0x30] sm:$0xf]
    %v252 = vld [vmem:[#allocation6 + $0x34] sm:$0xf]
    %v253 = vld [vmem:[#allocation6 + $0x38] sm:$0xf]
    %v254 = vld [vmem:[#allocation6 + $0x3c] sm:$0xf]
    %v255 = vld [vmem:[%s6] sm:$0x1]
    %v257 = vlaneseq
    %v258 = vshrl.u32 %v257, 7
    %v259 = vsub.s32 0, %v258
    %v260 = vrot.slane %v255, %v259
    %v278 = vunpack.c.l.b16 %v239
    %v279 = vunpack.c.l.b16 %v240
    %v280 = vunpack.c.l.b16 %v241
    %v281 = vunpack.c.l.b16 %v242
    %v282 = vunpack.c.l.b16 %v243
    %v283 = vunpack.c.l.b16 %v244
    %v284 = vunpack.c.l.b16 %v245
    %v285 = vunpack.c.l.b16 %v246
    %v286 = vunpack.c.l.b16 %v247
    %v287 = vunpack.c.l.b16 %v248
    %v288 = vunpack.c.l.b16 %v249
    %v289 = vunpack.c.l.b16 %v250
    %v290 = vunpack.c.l.b16 %v251
    %v291 = vunpack.c.l.b16 %v252
    %v292 = vunpack.c.l.b16 %v253
    %v293 = vunpack.c.l.b16 %v254
    %v294 = vpack.c.b16 %v279, %v278
    %v295 = vpack.c.b16 %v281, %v280
    %v296 = vpack.c.b16 %v283, %v282
    %v297 = vpack.c.b16 %v285, %v284
    %v298 = vpack.c.b16 %v287, %v286
    %v299 = vpack.c.b16 %v289, %v288
    %v300 = vpack.c.b16 %v291, %v290
    %v301 = vpack.c.b16 %v293, %v292
    %310 = vmatprep.subr.bf16.mxu0 0
    %311 = vmatpush1.bf16.msra.mxu0 %v301
    %312 = vmatprep.subr.bf16.mxu0 0
    %313 = vmatpush1.bf16.msra.mxu0 %v300
    %314 = vmatprep.subr.bf16.mxu0 0
    %315 = vmatpush1.bf16.msra.mxu0 %v299
    %316 = vmatprep.subr.bf16.mxu0 0
    %317 = vmatpush1.bf16.msra.mxu0 %v298
    %318 = vmatprep.subr.bf16.mxu0 0
    %319 = vmatpush1.bf16.msra.mxu0 %v297
    %320 = vmatprep.subr.bf16.mxu0 0
    %321 = vmatpush1.bf16.msra.mxu0 %v296
    %322 = vmatprep.subr.bf16.mxu0 0
    %323 = vmatpush1.bf16.msra.mxu0 %v295
    %324 = vmatprep.subr.bf16.mxu0 0
    %325 = vmatpush1.bf16.msra.mxu0 %v294
    %326 = vmatprep.subr.bf16.mxu0 0
    %327 = vmatpush2.bf16.msra.mxu0 0
    %328 = vmatprep.subr.bf16.mxu0 0
    %329 = vmatpush2.bf16.msra.mxu0 0
    %330 = vmatprep.subr.bf16.mxu0 0
    %331 = vmatpush2.bf16.msra.mxu0 0
    %332 = vmatprep.subr.bf16.mxu0 0
    %333 = vmatpush2.bf16.msra.mxu0 0
    %334 = vmatprep.subr.bf16.mxu0 0
    %335 = vmatpush2.bf16.msra.mxu0 0
    %336 = vmatprep.subr.bf16.mxu0 0
    %337 = vmatpush2.bf16.msra.mxu0 0
    %338 = vmatprep.subr.bf16.mxu0 0
    %339 = vmatpush2.bf16.msra.mxu0 0
    %340 = vmatprep.subr.bf16.mxu0 0
    %341 = vmatpush2.bf16.msra.mxu0 0
    %342 = vmatprep.mubr.bf16.mxu0 0
    %343 = vmatmul.mubr.bf16.gmra.mxu0 %v238
    %v344 = vpop.f32.mrf.mxu0
    %v345 = vadd.f32 %v260, %v344
    %v346 = vpop.f32.mrf.mxu0
    %v347 = vpop.f32.mrf.mxu0
    %v348 = vpop.f32.mrf.mxu0
    %349 = vdwg.mxu0
    %v350 = vpack.c.bf16 %v345, %v345
    %351 = vst [vmem:[%s7] sm:$0x1] %v350
    // Predicated region
    $region42: #{qnetwork_forward.1} parent=1 // pred_check
      _
    $region43: #{qnetwork_forward.1} parent=1 // pred_check_branch
      %353 = sbr.rel (0) target = $region45
    $region44: #{qnetwork_forward.1} parent=1 // pred_region
      _
    $region45: #{qnetwork_forward.1} parent=1 // pred_fallthru
      _
    // Predicated region
    $region46: #{qnetwork_forward.1} parent=1 // pred_check
      _
    $region47: #{qnetwork_forward.1} parent=1 // pred_check_branch
      %355 = sbr.rel (0) target = $region49
    $region48: #{qnetwork_forward.1} parent=1 // pred_region
      _
    $region49: #{qnetwork_forward.1} parent=1 // pred_fallthru
      _
    %356 = vsyncpa [#allocation3], 1
    %357 = vsyncpa [#allocation5], 1

</llo_original>
